<compile_context>
chip_gen: v7x
topology: tpu7x:2x2x1
jax: 0.10.0
libtpu: 0.0.40
codegen_flags: <defaults>
</compile_context>

<pallas_src>
import jax
import jax.numpy as jnp
from jax.experimental import pallas as pl
from jax.experimental.pallas import tpu as pltpu

CHANNELS = 3  # RGB
_LANE = 128
_SUB = 8
_CHUNK = 32   # rows per accumulation chunk (4 f32 vregs per channel slab)


def _make_to_rgb_kernel(c_in, c_out, chunk):
    def kernel(x_ref, w_ref, b_ref, o_ref):
        # x_ref: (1, c_in, t_r, 128) VMEM tile (spatial rows x lanes, lane-dense)
        # w_ref: (c_out*c_in,) f32 in SMEM (scalar reads)
        # b_ref: (c_out,)      f32 in SMEM
        # o_ref: (1, c_out, t_r, 128) VMEM
        t_r = x_ref.shape[2]
        slab = min(chunk, t_r)

        # Hoist the bias broadcasts to once per grid step (JAX does not CSE
        # broadcast_in_dim); accumulators start from these slabs.
        bias_slab = [jnp.full((slab, _LANE), b_ref[co], jnp.float32)
                     for co in range(c_out)]

        def do_chunk(start, rows):
            # Per-chunk live set: c_out accumulators (rows/8 vregs each) + one
            # input slab -> well under 64 vregs for rows == _CHUNK.
            accs = [bias_slab[co] if rows == slab else bias_slab[co][:rows, :]
                    for co in range(c_out)]
            for ci in range(c_in):
                xi = x_ref[0, ci, pl.ds(start, rows), :].astype(jnp.float32)
                for co in range(c_out):
                    # Scalar-operand FMA on the VPU; the implied scalar->vreg
                    # broadcast is amortized over rows/8 (>=4) vregs of work.
                    accs[co] = accs[co] + xi * w_ref[co * c_in + ci]
            for co in range(c_out):
                o_ref[0, co, pl.ds(start, rows), :] = (
                    jnp.tanh(accs[co]).astype(o_ref.dtype))

        n_full = t_r // chunk
        tail = t_r - n_full * chunk
        if n_full > 0:
            @pl.loop(0, n_full)
            def _(ic):
                do_chunk(pl.multiple_of(ic * chunk, chunk), chunk)
        if tail > 0:
            do_chunk(n_full * chunk, tail)

    return kernel


def to_rgb(x_nchw, weight, bias, *, target_tile_bytes=4 << 20):
    """y = tanh(conv1x1(x) + b); x NCHW, weight (C_out, C_in, 1, 1), bias (C_out,)."""
    N, C_in, H, W = x_nchw.shape
    C_out = weight.shape[0]
    HW = H * W

    # View the spatial dim as (rows, 128) so pixels sit on the lane axis.
    R = pl.cdiv(HW, _LANE)
    HW_pad = R * _LANE

    x = x_nchw.reshape(N, C_in, HW)                      # free reshape (contiguous)
    if HW_pad != HW:
        # TODO(synk): a ragged/masked last block would avoid this extra HBM pass;
        # only tiny non-128-multiple ProgGAN stages (4x4, 8x8) ever hit it.
        x = jnp.pad(x, ((0, 0), (0, 0), (0, HW_pad - HW)))
    x = x.reshape(N, C_in, R, _LANE)                     # free reshape

    itemsize = jnp.dtype(x.dtype).itemsize
    bytes_per_row = C_in * _LANE * itemsize

    # Spatial tile: ~target_tile_bytes of input per grid step (amortizes the
    # ~0.35us/step overhead even against v7x's ~3.2 TB/s HBM), floored at _CHUNK
    # rows independent of C_in, rounded to a multiple of _CHUNK.  The in-kernel
    # row-chunking keeps vreg pressure flat, so t_r is purely a DMA knob.
    budget_rows = max(_CHUNK, (target_tile_bytes // bytes_per_row) // _CHUNK * _CHUNK)
    t_r = R if R <= budget_rows else budget_rows

    # v7x has 2 TensorCores: with a single image make sure the (parallel) grid
    # has >= 2 roughly equal steps so both cores get work.  No-op for N >= 2.
    if N == 1 and t_r == R and R >= 2 * _SUB:
        t_r = pl.cdiv(pl.cdiv(R, 2), _SUB) * _SUB

    n_s = pl.cdiv(R, t_r)

    # Scoped-VMEM budget: double-buffered input + output tiles + margin.
    in_tile = C_in * t_r * _LANE * itemsize
    out_tile = C_out * t_r * _LANE * itemsize
    vmem_limit = int(max(2 * (in_tile + out_tile) + (2 << 20), 32 << 20))

    # Flat 1-D weights -> minimal SMEM padding; tiny, scalar-read in kernel.
    w_flat = weight.reshape(C_out * C_in).astype(jnp.float32)
    b_vec = bias.reshape(C_out).astype(jnp.float32)

    kernel = _make_to_rgb_kernel(C_in, C_out, _CHUNK)

    out = pl.pallas_call(
        kernel,
        out_shape=jax.ShapeDtypeStruct((N, C_out, R, _LANE), x_nchw.dtype),
        grid=(N, n_s),
        in_specs=[
            pl.BlockSpec((1, C_in, t_r, _LANE), lambda n, s: (n, 0, s, 0)),
            pl.BlockSpec(memory_space=pltpu.MemorySpace.SMEM),   # weights (scalars)
            pl.BlockSpec(memory_space=pltpu.MemorySpace.SMEM),   # bias (scalars)
        ],
        out_specs=pl.BlockSpec((1, C_out, t_r, _LANE), lambda n, s: (n, 0, s, 0)),
        compiler_params=pltpu.CompilerParams(
            dimension_semantics=("parallel", "parallel"),
            vmem_limit_bytes=vmem_limit),
    )(x, w_flat, b_vec)

    out = out.reshape(N, C_out, HW_pad)                  # free reshape
    if HW_pad != HW:
        out = out[:, :, :HW]
    return out.reshape(N, C_out, H, W)                   # free reshape (stays NCHW)


def _reference(x, weight, bias):
    c_out, c_in = weight.shape[0], weight.shape[1]
    return jnp.tanh(
        jnp.einsum("nchw,oc->nohw", x, weight.reshape(c_out, c_in))
        + bias.reshape(1, c_out, 1, 1)
    )


if __name__ == "__main__":
    key = jax.random.PRNGKey(0)
    k_x, k_w, k_b, k_x2, k_w2, k_b2 = jax.random.split(key, 6)

    # --- Test 1: small shapes consistent with toRGB(fi=4): x (2, 4, 16, 16) ---
    N, fi, H, W = 2, 4, 16, 16
    x = jax.random.normal(k_x, (N, fi, H, W), dtype=jnp.float32)
    weight = 0.1 * jax.random.normal(k_w, (CHANNELS, fi, 1, 1), dtype=jnp.float32)
    bias = 0.1 * jax.random.normal(k_b, (CHANNELS,), dtype=jnp.float32)

    y = to_rgb(x, weight, bias)
    jax.block_until_ready(y)
    assert y.shape == (N, CHANNELS, H, W)
    assert jnp.allclose(y, _reference(x, weight, bias), atol=1e-5, rtol=1e-5)

    # --- Test 2: exercises N==1 spatial split, chunk loop + tail, and a ragged
    # (partial) last spatial block: x (1, 16, 96, 96) -> R=72, t_r=40, n_s=2 ---
    N2, fi2, H2, W2 = 1, 16, 96, 96
    x2 = jax.random.normal(k_x2, (N2, fi2, H2, W2), dtype=jnp.float32)
    w2 = 0.1 * jax.random.normal(k_w2, (CHANNELS, fi2, 1, 1), dtype=jnp.float32)
    b2 = 0.1 * jax.random.normal(k_b2, (CHANNELS,), dtype=jnp.float32)

    y2 = to_rgb(x2, w2, b2)
    jax.block_until_ready(y2)
    assert y2.shape == (N2, CHANNELS, H2, W2)
    assert jnp.allclose(y2, _reference(x2, w2, b2), atol=1e-5, rtol=1e-5)

    print("KERNEL_OK")
</pallas_src>

<mosaic_0001>
module attributes {stable_mosaic.version = 11 : i64} {
  func.func @kernel(%arg0: i32, %arg1: i32, %arg2: memref<1x4x2x128xf32, #tpu.memory_space<vmem>>, %arg3: memref<12xf32, #tpu.memory_space<smem>>, %arg4: memref<3xf32, #tpu.memory_space<smem>>, %arg5: memref<1x3x2x128xf32, #tpu.memory_space<vmem>>) attributes {dimension_semantics = [#tpu.dimension_semantics<parallel>, #tpu.dimension_semantics<parallel>], iteration_bounds = array<i64: 2, 1>, scalar_prefetch = 0 : i64, scratch_operands = 0 : i64, tpu.core_type = #tpu.core_type<tc>, window_params = [{transform_indices = @transform_0, window_bounds = array<i64: 1, 4, 2, 128>}, {transform_indices = @transform_1, window_bounds = array<i64: 12>}, {transform_indices = @transform_2, window_bounds = array<i64: 3>}, {transform_indices = @transform_3, window_bounds = array<i64: 1, 3, 2, 128>}]} {
    %c0 = arith.constant 0 : index
    %0 = memref.load %arg4[%c0] : memref<3xf32, #tpu.memory_space<smem>>
    %1 = vector.broadcast %0 : f32 to vector<2x128xf32>
    %c1 = arith.constant 1 : index
    %2 = memref.load %arg4[%c1] : memref<3xf32, #tpu.memory_space<smem>>
    %3 = vector.broadcast %2 : f32 to vector<2x128xf32>
    %c2 = arith.constant 2 : index
    %4 = memref.load %arg4[%c2] : memref<3xf32, #tpu.memory_space<smem>>
    %5 = vector.broadcast %4 : f32 to vector<2x128xf32>
    %c0_0 = arith.constant 0 : index
    %c0_1 = arith.constant 0 : index
    %c0_2 = arith.constant 0 : index
    %c0_3 = arith.constant 0 : index
    %6 = vector.load %arg2[%c0_0, %c0_1, %c0_2, %c0_3] : memref<1x4x2x128xf32, #tpu.memory_space<vmem>>, vector<1x1x2x128xf32>
    %7 = vector.shape_cast %6 : vector<1x1x2x128xf32> to vector<2x128xf32>
    %c0_4 = arith.constant 0 : index
    %8 = memref.load %arg3[%c0_4] : memref<12xf32, #tpu.memory_space<smem>>
    %9 = vector.broadcast %8 : f32 to vector<2x128xf32>
    %10 = arith.mulf %7, %9 : vector<2x128xf32>
    %11 = arith.addf %1, %10 : vector<2x128xf32>
    %c4 = arith.constant 4 : index
    %12 = memref.load %arg3[%c4] : memref<12xf32, #tpu.memory_space<smem>>
    %13 = vector.broadcast %12 : f32 to vector<2x128xf32>
    %14 = arith.mulf %7, %13 : vector<2x128xf32>
    %15 = arith.addf %3, %14 : vector<2x128xf32>
    %c8 = arith.constant 8 : index
    %16 = memref.load %arg3[%c8] : memref<12xf32, #tpu.memory_space<smem>>
    %17 = vector.broadcast %16 : f32 to vector<2x128xf32>
    %18 = arith.mulf %7, %17 : vector<2x128xf32>
    %19 = arith.addf %5, %18 : vector<2x128xf32>
    %c0_5 = arith.constant 0 : index
    %c1_6 = arith.constant 1 : index
    %c0_7 = arith.constant 0 : index
    %c0_8 = arith.constant 0 : index
    %20 = vector.load %arg2[%c0_5, %c1_6, %c0_7, %c0_8] : memref<1x4x2x128xf32, #tpu.memory_space<vmem>>, vector<1x1x2x128xf32>
    %21 = vector.shape_cast %20 : vector<1x1x2x128xf32> to vector<2x128xf32>
    %c1_9 = arith.constant 1 : index
    %22 = memref.load %arg3[%c1_9] : memref<12xf32, #tpu.memory_space<smem>>
    %23 = vector.broadcast %22 : f32 to vector<2x128xf32>
    %24 = arith.mulf %21, %23 : vector<2x128xf32>
    %25 = arith.addf %11, %24 : vector<2x128xf32>
    %c5 = arith.constant 5 : index
    %26 = memref.load %arg3[%c5] : memref<12xf32, #tpu.memory_space<smem>>
    %27 = vector.broadcast %26 : f32 to vector<2x128xf32>
    %28 = arith.mulf %21, %27 : vector<2x128xf32>
    %29 = arith.addf %15, %28 : vector<2x128xf32>
    %c9 = arith.constant 9 : index
    %30 = memref.load %arg3[%c9] : memref<12xf32, #tpu.memory_space<smem>>
    %31 = vector.broadcast %30 : f32 to vector<2x128xf32>
    %32 = arith.mulf %21, %31 : vector<2x128xf32>
    %33 = arith.addf %19, %32 : vector<2x128xf32>
    %c0_10 = arith.constant 0 : index
    %c2_11 = arith.constant 2 : index
    %c0_12 = arith.constant 0 : index
    %c0_13 = arith.constant 0 : index
    %34 = vector.load %arg2[%c0_10, %c2_11, %c0_12, %c0_13] : memref<1x4x2x128xf32, #tpu.memory_space<vmem>>, vector<1x1x2x128xf32>
    %35 = vector.shape_cast %34 : vector<1x1x2x128xf32> to vector<2x128xf32>
    %c2_14 = arith.constant 2 : index
    %36 = memref.load %arg3[%c2_14] : memref<12xf32, #tpu.memory_space<smem>>
    %37 = vector.broadcast %36 : f32 to vector<2x128xf32>
    %38 = arith.mulf %35, %37 : vector<2x128xf32>
    %39 = arith.addf %25, %38 : vector<2x128xf32>
    %c6 = arith.constant 6 : index
    %40 = memref.load %arg3[%c6] : memref<12xf32, #tpu.memory_space<smem>>
    %41 = vector.broadcast %40 : f32 to vector<2x128xf32>
    %42 = arith.mulf %35, %41 : vector<2x128xf32>
    %43 = arith.addf %29, %42 : vector<2x128xf32>
    %c10 = arith.constant 10 : index
    %44 = memref.load %arg3[%c10] : memref<12xf32, #tpu.memory_space<smem>>
    %45 = vector.broadcast %44 : f32 to vector<2x128xf32>
    %46 = arith.mulf %35, %45 : vector<2x128xf32>
    %47 = arith.addf %33, %46 : vector<2x128xf32>
    %c0_15 = arith.constant 0 : index
    %c3 = arith.constant 3 : index
    %c0_16 = arith.constant 0 : index
    %c0_17 = arith.constant 0 : index
    %48 = vector.load %arg2[%c0_15, %c3, %c0_16, %c0_17] : memref<1x4x2x128xf32, #tpu.memory_space<vmem>>, vector<1x1x2x128xf32>
    %49 = vector.shape_cast %48 : vector<1x1x2x128xf32> to vector<2x128xf32>
    %c3_18 = arith.constant 3 : index
    %50 = memref.load %arg3[%c3_18] : memref<12xf32, #tpu.memory_space<smem>>
    %51 = vector.broadcast %50 : f32 to vector<2x128xf32>
    %52 = arith.mulf %49, %51 : vector<2x128xf32>
    %53 = arith.addf %39, %52 : vector<2x128xf32>
    %c7 = arith.constant 7 : index
    %54 = memref.load %arg3[%c7] : memref<12xf32, #tpu.memory_space<smem>>
    %55 = vector.broadcast %54 : f32 to vector<2x128xf32>
    %56 = arith.mulf %49, %55 : vector<2x128xf32>
    %57 = arith.addf %43, %56 : vector<2x128xf32>
    %c11 = arith.constant 11 : index
    %58 = memref.load %arg3[%c11] : memref<12xf32, #tpu.memory_space<smem>>
    %59 = vector.broadcast %58 : f32 to vector<2x128xf32>
    %60 = arith.mulf %49, %59 : vector<2x128xf32>
    %61 = arith.addf %47, %60 : vector<2x128xf32>
    %62 = math.tanh %53 : vector<2x128xf32>
    %c0_19 = arith.constant 0 : index
    %c0_20 = arith.constant 0 : index
    %c0_21 = arith.constant 0 : index
    %c0_22 = arith.constant 0 : index
    %63 = vector.load %arg5[%c0_19, %c0_20, %c0_21, %c0_22] : memref<1x3x2x128xf32, #tpu.memory_space<vmem>>, vector<1x1x2x128xf32>
    %64 = vector.shape_cast %63 : vector<1x1x2x128xf32> to vector<2x128xf32>
    %65 = vector.shape_cast %62 : vector<2x128xf32> to vector<1x1x2x128xf32>
    tpu.vector_store %arg5[%c0_19, %c0_20, %c0_21, %c0_22], %65 {strides = array<i32>} : memref<1x3x2x128xf32, #tpu.memory_space<vmem>>, vector<1x1x2x128xf32>,
    %66 = math.tanh %57 : vector<2x128xf32>
    %c0_23 = arith.constant 0 : index
    %c1_24 = arith.constant 1 : index
    %c0_25 = arith.constant 0 : index
    %c0_26 = arith.constant 0 : index
    %67 = vector.load %arg5[%c0_23, %c1_24, %c0_25, %c0_26] : memref<1x3x2x128xf32, #tpu.memory_space<vmem>>, vector<1x1x2x128xf32>
    %68 = vector.shape_cast %67 : vector<1x1x2x128xf32> to vector<2x128xf32>
    %69 = vector.shape_cast %66 : vector<2x128xf32> to vector<1x1x2x128xf32>
    tpu.vector_store %arg5[%c0_23, %c1_24, %c0_25, %c0_26], %69 {strides = array<i32>} : memref<1x3x2x128xf32, #tpu.memory_space<vmem>>, vector<1x1x2x128xf32>,
    %70 = math.tanh %61 : vector<2x128xf32>
    %c0_27 = arith.constant 0 : index
    %c2_28 = arith.constant 2 : index
    %c0_29 = arith.constant 0 : index
    %c0_30 = arith.constant 0 : index
    %71 = vector.load %arg5[%c0_27, %c2_28, %c0_29, %c0_30] : memref<1x3x2x128xf32, #tpu.memory_space<vmem>>, vector<1x1x2x128xf32>
    %72 = vector.shape_cast %71 : vector<1x1x2x128xf32> to vector<2x128xf32>
    %73 = vector.shape_cast %70 : vector<2x128xf32> to vector<1x1x2x128xf32>
    tpu.vector_store %arg5[%c0_27, %c2_28, %c0_29, %c0_30], %73 {strides = array<i32>} : memref<1x3x2x128xf32, #tpu.memory_space<vmem>>, vector<1x1x2x128xf32>,
    return
  }
  func.func @transform_0(%arg0: i32, %arg1: i32) -> (i32, i32, i32, i32) {
    %c0_i32 = arith.constant 0 : i32
    %c0_i32_0 = arith.constant 0 : i32
    %c0_i32_1 = arith.constant 0 : i32
    return %arg0, %c0_i32, %arg1, %c0_i32_0 : i32, i32, i32, i32
  }
  func.func @transform_1(%arg0: i32, %arg1: i32) -> i32 {
    %c0_i32 = arith.constant 0 : i32
    %c0_i32_0 = arith.constant 0 : i32
    return %c0_i32 : i32
  }
  func.func @transform_2(%arg0: i32, %arg1: i32) -> i32 {
    %c0_i32 = arith.constant 0 : i32
    %c0_i32_0 = arith.constant 0 : i32
    return %c0_i32 : i32
  }
  func.func @transform_3(%arg0: i32, %arg1: i32) -> (i32, i32, i32, i32) {
    %c0_i32 = arith.constant 0 : i32
    %c0_i32_0 = arith.constant 0 : i32
    %c0_i32_1 = arith.constant 0 : i32
    return %arg0, %c0_i32, %arg1, %c0_i32_0 : i32, i32, i32, i32
  }
}

</mosaic_0001>

<llo_original>
// kernel: tpu_custom_call.1
$region0: #{tpu_custom_call.1}
  #allocation0 [shape = 'u32[]', space=smem, size = 0x4, offset = 0x4, fixed_abs, tag = 'smem constant byte address 0x4 - core index']
  #allocation1 [shape = 'u32[144,128]{1,0:T(1,128)}', space=vmem, size = 0x12000, scoped, tag = 'internal scratch']
  %s0 = inlined_call_operand.hbm [shape: f32[2,4,2,128], index: 0, kind: input, shape index: {}]
  %s1 = inlined_call_operand.vmem [shape: f32[12], index: 1, kind: input, shape index: {}]
  %s2 = inlined_call_operand.vmem [shape: f32[3], index: 2, kind: input, shape index: {}]
  %s3 = inlined_call_operand.hbm [shape: f32[2,3,2,128], index: 3, kind: output, shape index: {}]
  %s4 = sld [smem:[#allocation0]]
  $region57: #{tpu_custom_call.1} parent=0
    _
  %s6 = ssub.s32 1, %s4
  %s7 = scalar_select 0, %s6, %s4
  $region1: #{tpu_custom_call.1} parent=0
    #allocation2 [shape = 'u8[8192]{0}', space=vmem, size = 0x2000, scoped, tag = 'input window, operand 0']
    #allocation3 [shape = 's32[2]{0}', space=sflag, size = 0x8, scoped, tag = 'scoped memory for tpu_custom_call.1']
    #allocation4 [shape = 's32[2]{0}', space=sflag, size = 0x8, scoped, tag = 'scoped memory for tpu_custom_call.1']
    #allocation5 [shape = 's32[2]{0}', space=sflag, size = 0x8, scoped, tag = 'scoped memory for tpu_custom_call.1']
    #allocation6 [shape = 'u8[512]{0}', space=smem, size = 0x200, scoped, tag = 'input window, operand 1, single buffered']
    #allocation7 [shape = 'u8[512]{0}', space=smem, size = 0x200, scoped, tag = 'input window, operand 2, single buffered']
    #allocation8 [shape = 's32[1]{0}', space=sflag, size = 0x4, scoped, tag = 'scoped memory for tpu_custom_call.1']
    #allocation9 [shape = 'u8[6144]{0}', space=vmem, size = 0x1800, scoped, tag = 'output window, operand 0']
    %8 = vsyncpa [#allocation3], 0
    %s9 = scalar_lea.sflag [#allocation3], 1
    %10 = vsyncpa %s9, 0
    %11 = vsyncpa [#allocation5], 0
    %12 = vsyncpa [#allocation8], 0
    %13 = vsyncpa [#allocation4], 0
    %s14 = scalar_lea.sflag [#allocation4], 1
    %15 = vsyncpa %s14, 0
    loop: start=0, step=1, limit=4
    $region2: #{tpu_custom_call.1} parent=1 // loop_pre_header
      _
    $region3: #{tpu_custom_call.1} parent=1 // loop_header
      %s17 = sphi 0, %s21
      %p18 = scmp.ge.s32.totalorder %s17, 4
      %s24 = sphi 0, %s36
      %s25 = sphi 0, %s32
      %s26 = sphi 0, %s24
      %s27 = sphi 0, %s25
      %s28 = sphi 0, %s26
      %s29 = sphi 0, %s27
      %s41 = sphi 0, %s43
      %s44 = sphi 0, %s41
      %s45 = sphi 0, %s44
      %s61 = sphi 0, %s45
      %s65 = sphi 0, %s65
      %s67 = sphi 0, %s65
      %s68 = sphi 0, %s67
      %s82 = sphi 0, %s68
      %s86 = sphi 0, %s86
      %s88 = sphi 0, %s86
      %s89 = sphi 0, %s88
      %s103 = sphi 0, %s89
      %s111 = sphi 0, %s113
      %s114 = sphi 0, %s111
      %s115 = sphi 0, %s114
      %s131 = sphi 0, %s115
    $region4: #{tpu_custom_call.1} parent=1 // loop_header_branch
      %20 = sbr.rel (%p18) target = $region8
    $region5: #{tpu_custom_call.1} parent=1 // loop_body
      %s22 = ssub.s32 %s17, 1
      %s23 = ssub.s32 %s17, 2
      %s30 = sadd.s32 1, %s25
      %p31 = scmp.ge.s32.totalorder %s30, 1
      %s32 = scalar_select %p31, 0, %s30
      %s33 = sadd.s32 1, %s24
      %s34 = scalar_select %p31, %s33, %s24
      %p35 = scmp.ge.s32.totalorder %s34, 2
      %s36 = scalar_select %p35, 0, %s34
      %s37 = ssub.s32 %s24, %s36
      %s38 = ssub.s32 %s25, %s32
      %s39 = sor.u32 %s37, %s38
      %p40 = scmp.eq.s32.totalorder %s39, 0
      %s42 = sadd.s32 %s41, 1
      %s43 = scalar_select %p40, %s41, %s42
      %p46 = pneg %p40
      %p47 = scmp.eq.s32.totalorder %s17, 1
      %p48 = por %p46, %p47
      %p49 = scmp.ne.s32.totalorder %s41, %s44
      %p50 = scmp.eq.s32.totalorder %s17, 0
      %p51 = por %p49, %p50
      %p52 = scmp.ne.s32.totalorder %s41, %s44
      %p53 = scmp.eq.s32.totalorder %s22, 1
      %p54 = por %p52, %p53
      %p55 = scmp.ne.s32.totalorder %s44, %s45
      %p56 = scmp.eq.s32.totalorder %s22, 0
      %p57 = por %p55, %p56
      %p58 = scmp.ne.s32.totalorder %s44, %s45
      %p59 = scmp.eq.s32.totalorder %s23, 1
      %p60 = por %p58, %p59
      %p62 = scmp.ne.s32.totalorder %s45, %s61
      %p63 = scmp.eq.s32.totalorder %s23, 0
      %p64 = por %p62, %p63
      %s66 = sadd.s32 %s65, 1
      %p69 = scmp.eq.s32.totalorder %s17, 1
      %p70 = scmp.ne.s32.totalorder %s65, %s67
      %p71 = scmp.eq.s32.totalorder %s17, 0
      %p72 = por %p70, %p71
      %p73 = scmp.ne.s32.totalorder %s65, %s67
      %p74 = scmp.eq.s32.totalorder %s22, 1
      %p75 = por %p73, %p74
      %p76 = scmp.ne.s32.totalorder %s67, %s68
      %p77 = scmp.eq.s32.totalorder %s22, 0
      %p78 = por %p76, %p77
      %p79 = scmp.ne.s32.totalorder %s67, %s68
      %p80 = scmp.eq.s32.totalorder %s23, 1
      %p81 = por %p79, %p80
      %p83 = scmp.ne.s32.totalorder %s68, %s82
      %p84 = scmp.eq.s32.totalorder %s23, 0
      %p85 = por %p83, %p84
      %s87 = sadd.s32 %s86, 1
      %p90 = scmp.eq.s32.totalorder %s17, 1
      %p91 = scmp.ne.s32.totalorder %s86, %s88
      %p92 = scmp.eq.s32.totalorder %s17, 0
      %p93 = por %p91, %p92
      %p94 = scmp.ne.s32.totalorder %s86, %s88
      %p95 = scmp.eq.s32.totalorder %s22, 1
      %p96 = por %p94, %p95
      %p97 = scmp.ne.s32.totalorder %s88, %s89
      %p98 = scmp.eq.s32.totalorder %s22, 0
      %p99 = por %p97, %p98
      %p100 = scmp.ne.s32.totalorder %s88, %s89
      %p101 = scmp.eq.s32.totalorder %s23, 1
      %p102 = por %p100, %p101
      %p104 = scmp.ne.s32.totalorder %s89, %s103
      %p105 = scmp.eq.s32.totalorder %s23, 0
      %p106 = por %p104, %p105
      %s107 = ssub.s32 %s24, %s36
      %s108 = ssub.s32 %s25, %s32
      %s109 = sor.u32 %s107, %s108
      %p110 = scmp.eq.s32.totalorder %s109, 0
      %s112 = sadd.s32 %s111, 1
      %s113 = scalar_select %p110, %s111, %s112
      %p116 = pneg %p110
      %p117 = scmp.eq.s32.totalorder %s17, 1
      %p118 = por %p116, %p117
      %p119 = scmp.ne.s32.totalorder %s111, %s114
      %p120 = scmp.eq.s32.totalorder %s17, 0
      %p121 = por %p119, %p120
      %p122 = scmp.ne.s32.totalorder %s111, %s114
      %p123 = scmp.eq.s32.totalorder %s22, 1
      %p124 = por %p122, %p123
      %p125 = scmp.ne.s32.totalorder %s114, %s115
      %p126 = scmp.eq.s32.totalorder %s22, 0
      %p127 = por %p125, %p126
      %p128 = scmp.ne.s32.totalorder %s114, %s115
      %p129 = scmp.eq.s32.totalorder %s23, 1
      %p130 = por %p128, %p129
      %p132 = scmp.ne.s32.totalorder %s115, %s131
      %p133 = scmp.eq.s32.totalorder %s23, 0
      %p134 = por %p132, %p133
      %p135 = scmp.le.s32.totalorder 1, %s17
      %p136 = scmp.lt.s32.totalorder %s17, 3
      %p137 = pnand %p135, %p136
      %p138 = pneg %p137
      // Predicated region
      $region9: #{tpu_custom_call.1} parent=5 // pred_check
        _
      $region10: #{tpu_custom_call.1} parent=5 // pred_check_branch
        %140 = sbr.rel (%p137) target = $region12
      $region11: #{tpu_custom_call.1} parent=5 // pred_region
        %s141 = ssub.s32 %s17, 1
        // Predicated region
        $region13: #{tpu_custom_call.1} parent=11 // pred_check
          %p142 = pneg %p78
        $region14: #{tpu_custom_call.1} parent=11 // pred_check_branch
          %144 = sbr.rel (%p142) target = $region16
        $region15: #{tpu_custom_call.1} parent=11 // pred_region
          %s146 = ssub.s32 16, 16
          %147 = vsyncadd [#allocation5], %s146
          %s149 = sshll.u32 %s1, 4
          %s150 = int_to_ptr.vmem [resolvable:$true] %s149
          %152 = dma.vmem_to_smem %s150, 16, [#allocation6], [#allocation5]
        $region16: #{tpu_custom_call.1} parent=11 // pred_fallthru
          _
        // Predicated region
        $region17: #{tpu_custom_call.1} parent=11 // pred_check
          %p153 = pneg %p99
        $region18: #{tpu_custom_call.1} parent=11 // pred_check_branch
          %155 = sbr.rel (%p153) target = $region20
        $region19: #{tpu_custom_call.1} parent=11 // pred_region
          %s157 = ssub.s32 16, 16
          %158 = vsyncadd [#allocation8], %s157
          %s160 = sshll.u32 %s2, 4
          %s161 = int_to_ptr.vmem [resolvable:$true] %s160
          %163 = dma.vmem_to_smem %s161, 16, [#allocation7], [#allocation8]
        $region20: #{tpu_custom_call.1} parent=11 // pred_fallthru
          _
      $region12: #{tpu_custom_call.1} parent=5 // pred_fallthru
        _
      %p164 = scmp.lt.s32.totalorder %s17, 2
      // Predicated region
      $region21: #{tpu_custom_call.1} parent=5 // pred_check
        %p165 = pneg %p164
      $region22: #{tpu_custom_call.1} parent=5 // pred_check_branch
        %167 = sbr.rel (%p165) target = $region24
      $region23: #{tpu_custom_call.1} parent=5 // pred_region
        // Predicated region
        $region25: #{tpu_custom_call.1} parent=23 // pred_check
          %p168 = pneg %p51
        $region26: #{tpu_custom_call.1} parent=23 // pred_check_branch
          %170 = sbr.rel (%p168) target = $region28
        $region27: #{tpu_custom_call.1} parent=23 // pred_region
          %s171 = sand.u32 %s41, 1
          %s172 = scalar_lea.sflag [#allocation3], %s171
          %s173 = sand.u32 %s41, 1
          %s174 = smul.addr %s173, 8
          %s175 = scalar_lea.vmem [#allocation2], %s174
          %s177 = ssub.s32 128, 128
          %178 = vsyncadd %s172, %s177
          %s179 = smul.addr %s24, 4
          %s180 = sadd.s32 %s25, %s179
          %s181 = smul.addr %s180, 32
          %s182 = scalar_lea.hbm %s0, %s181
          %s183 = sshll.u32 %s175, 4
          %s184 = int_to_ptr.vmem [resolvable:$true] %s183
          %189 = dma.hbm_to_vmem [thread:$0]  %s182, 128, %s184, %s172, 32, 32, 2
        $region28: #{tpu_custom_call.1} parent=23 // pred_fallthru
          _
      $region24: #{tpu_custom_call.1} parent=5 // pred_fallthru
        _
      %p190 = scmp.le.s32.totalorder 1, %s17
      %p191 = scmp.lt.s32.totalorder %s17, 3
      %p192 = pnand %p190, %p191
      %p193 = pneg %p192
      // Predicated region
      $region29: #{tpu_custom_call.1} parent=5 // pred_check
        _
      $region30: #{tpu_custom_call.1} parent=5 // pred_check_branch
        %195 = sbr.rel (%p192) target = $region32
      $region31: #{tpu_custom_call.1} parent=5 // pred_region
        %s196 = ssub.s32 %s17, 1
        %s197 = sand.u32 %s44, 1
        %s198 = scalar_lea.sflag [#allocation3], %s197
        %s199 = sand.u32 %s44, 1
        %s200 = smul.addr %s199, 8
        %s201 = scalar_lea.vmem [#allocation2], %s200
        // Predicated region
        $region33: #{tpu_custom_call.1} parent=31 // pred_check
          %p202 = pneg %p57
        $region34: #{tpu_custom_call.1} parent=31 // pred_check_branch
          %204 = sbr.rel (%p202) target = $region36
        $region35: #{tpu_custom_call.1} parent=31 // pred_region
          %205 = dma.done %s198, 128
        $region36: #{tpu_custom_call.1} parent=31 // pred_fallthru
          _
        // Predicated region
        $region37: #{tpu_custom_call.1} parent=31 // pred_check
          %p206 = pneg %p78
        $region38: #{tpu_custom_call.1} parent=31 // pred_check_branch
          %208 = sbr.rel (%p206) target = $region40
        $region39: #{tpu_custom_call.1} parent=31 // pred_region
          %209 = dma.done [#allocation5], 16
        $region40: #{tpu_custom_call.1} parent=31 // pred_fallthru
          _
        // Predicated region
        $region41: #{tpu_custom_call.1} parent=31 // pred_check
          %p210 = pneg %p99
        $region42: #{tpu_custom_call.1} parent=31 // pred_check_branch
          %212 = sbr.rel (%p210) target = $region44
        $region43: #{tpu_custom_call.1} parent=31 // pred_region
          %213 = dma.done [#allocation8], 16
        $region44: #{tpu_custom_call.1} parent=31 // pred_fallthru
          _
        %214 = sfence
        %s215 = sand.u32 %s44, 1
        %s216 = scalar_lea.sflag [#allocation3], %s215
        %s217 = sand.u32 %s44, 1
        %s218 = smul.addr %s217, 8
        %s219 = scalar_lea.vmem [#allocation2], %s218
        %p220 = pneg %p57
        %p221 = pneg %p54
        %p222 = pneg %p78
        %p223 = pneg %p75
        %p224 = pneg %p99
        %p225 = pneg %p96
        %p226 = pneg %p127
        %p227 = pneg %p124
        %s228 = sand.u32 %s114, 1
        %s229 = scalar_lea.sflag [#allocation4], %s228
        %s230 = sand.u32 %s114, 1
        %s231 = smul.addr %s230, 6
        %s232 = scalar_lea.vmem [#allocation9], %s231
        %s233 = sld [smem:[#allocation7]]
        %v234 = vstv %s233
        %s235 = sld [smem:[#allocation7 + $0x1]]
        %v236 = vstv %s235
        %s237 = sld [smem:[#allocation7 + $0x2]]
        %v238 = vstv %s237
        %v239 = vld [vmem:[%s201] sm:$0x3]
        %s240 = sld [smem:[#allocation6]]
        %v241 = vstv %s240
        %v242 = vmul.f32 %v239, %v241
        %v243 = vadd.f32 %v234, %v242
        %s244 = sld [smem:[#allocation6 + $0x4]]
        %v245 = vstv %s244
        %v246 = vmul.f32 %v239, %v245
        %v247 = vadd.f32 %v236, %v246
        %s248 = sld [smem:[#allocation6 + $0x8]]
        %v249 = vstv %s248
        %v250 = vmul.f32 %v239, %v249
        %v251 = vadd.f32 %v238, %v250
        %s252 = scalar_lea.vmem %s201, 2 [#allocation2]
        %v253 = vld [vmem:[%s252] sm:$0x3]
        %s254 = sld [smem:[#allocation6 + $0x1]]
        %v255 = vstv %s254
        %v256 = vmul.f32 %v253, %v255
        %v257 = vadd.f32 %v243, %v256
        %s258 = sld [smem:[#allocation6 + $0x5]]
        %v259 = vstv %s258
        %v260 = vmul.f32 %v253, %v259
        %v261 = vadd.f32 %v247, %v260
        %s262 = sld [smem:[#allocation6 + $0x9]]
        %v263 = vstv %s262
        %v264 = vmul.f32 %v253, %v263
        %v265 = vadd.f32 %v251, %v264
        %s266 = scalar_lea.vmem %s201, 4 [#allocation2]
        %v267 = vld [vmem:[%s266] sm:$0x3]
        %s268 = sld [smem:[#allocation6 + $0x2]]
        %v269 = vstv %s268
        %v270 = vmul.f32 %v267, %v269
        %v271 = vadd.f32 %v257, %v270
        %s272 = sld [smem:[#allocation6 + $0x6]]
        %v273 = vstv %s272
        %v274 = vmul.f32 %v267, %v273
        %v275 = vadd.f32 %v261, %v274
        %s276 = sld [smem:[#allocation6 + $0xa]]
        %v277 = vstv %s276
        %v278 = vmul.f32 %v267, %v277
        %v279 = vadd.f32 %v265, %v278
        %s280 = scalar_lea.vmem %s201, 6 [#allocation2]
        %v281 = vld [vmem:[%s280] sm:$0x3]
        %s282 = sld [smem:[#allocation6 + $0x3]]
        %v283 = vstv %s282
        %v284 = vmul.f32 %v281, %v283
        %v285 = vadd.f32 %v271, %v284
        %s286 = sld [smem:[#allocation6 + $0x7]]
        %v287 = vstv %s286
        %v288 = vmul.f32 %v281, %v287
        %v289 = vadd.f32 %v275, %v288
        %s290 = sld [smem:[#allocation6 + $0xb]]
        %v291 = vstv %s290
        %v292 = vmul.f32 %v281, %v291
        %v293 = vadd.f32 %v279, %v292
        %v294 = vtanh.pop %v285
        %295 = vst [vmem:[%s232] sm:$0x3] %v294
        %v296 = vtanh.pop %v289
        %s297 = scalar_lea.vmem %s232, 2 [#allocation9]
        %298 = vst [vmem:[%s297] sm:$0x3] %v296
        %v299 = vtanh.pop %v293
        %s300 = scalar_lea.vmem %s232, 4 [#allocation9]
        %301 = vst [vmem:[%s300] sm:$0x3] %v299
        %s302 = sand.u32 %s114, 1
        %s303 = scalar_lea.sflag [#allocation4], %s302
        %s304 = sand.u32 %s114, 1
        %s305 = smul.addr %s304, 6
        %s306 = scalar_lea.vmem [#allocation9], %s305
        // Predicated region
        $region45: #{tpu_custom_call.1} parent=31 // pred_check
          %p307 = pneg %p124
        $region46: #{tpu_custom_call.1} parent=31 // pred_check_branch
          %309 = sbr.rel (%p307) target = $region48
        $region47: #{tpu_custom_call.1} parent=31 // pred_region
          %s311 = ssub.s32 96, 96
          %312 = vsyncadd %s303, %s311
          %s313 = smul.addr %s26, 3
          %s314 = sadd.s32 %s27, %s313
          %s315 = smul.addr %s314, 32
          %s316 = scalar_lea.hbm %s3, %s315
          %s317 = sshll.u32 %s306, 4
          %s318 = int_to_ptr.vmem [resolvable:$true] %s317
          %323 = dma.vmem_to_hbm [thread:$0]  %s318, 96, %s316, %s303, 32, 32, 2
        $region48: #{tpu_custom_call.1} parent=31 // pred_fallthru
          _
      $region32: #{tpu_custom_call.1} parent=5 // pred_fallthru
        _
      %p324 = scmp.le.s32.totalorder 2, %s17
      // Predicated region
      $region49: #{tpu_custom_call.1} parent=5 // pred_check
        %p325 = pneg %p324
      $region50: #{tpu_custom_call.1} parent=5 // pred_check_branch
        %327 = sbr.rel (%p325) target = $region52
      $region51: #{tpu_custom_call.1} parent=5 // pred_region
        %s328 = ssub.s32 %s17, 2
        // Predicated region
        $region53: #{tpu_custom_call.1} parent=51 // pred_check
          %p329 = pneg %p130
        $region54: #{tpu_custom_call.1} parent=51 // pred_check_branch
          %331 = sbr.rel (%p329) target = $region56
        $region55: #{tpu_custom_call.1} parent=51 // pred_region
          %s332 = sand.u32 %s115, 1
          %s333 = scalar_lea.sflag [#allocation4], %s332
          %s334 = sand.u32 %s115, 1
          %s335 = smul.addr %s334, 6
          %s336 = scalar_lea.vmem [#allocation9], %s335
          %337 = dma.done %s333, 96
        $region56: #{tpu_custom_call.1} parent=51 // pred_fallthru
          _
      $region52: #{tpu_custom_call.1} parent=5 // pred_fallthru
        _
    $region6: #{tpu_custom_call.1} parent=1 // loop_footer
      %s21 = sadd.s32 1, %s17
    $region7: #{tpu_custom_call.1} parent=1 // loop_footer_branch
      %16 = sbr.rel target = $region3
    $region8: #{tpu_custom_call.1} parent=1 // loop_exit
      _
    %338 = vsyncpa [#allocation3], 1
    %s339 = scalar_lea.sflag [#allocation3], 1
    %340 = vsyncpa %s339, 1
    %341 = vsyncpa [#allocation4], 1
    %s342 = scalar_lea.sflag [#allocation4], 1
    %343 = vsyncpa %s342, 1
    %344 = vsyncpa [#allocation5], 1
    %s345 = scalar_lea.sflag [#allocation5], 1
    %346 = vsyncpa %s345, 1
    %347 = vsyncpa [#allocation8], 1

</llo_original>
